<compile_context>
chip_gen: v6e
topology: v6e:2x2x1
jax: 0.10.0
libtpu: 0.0.40
codegen_flags: <defaults>
</compile_context>

<pallas_src>
import jax
import jax.numpy as jnp
from jax import lax
from jax.experimental import pallas as pl
from jax.experimental.pallas import tpu as pltpu

# ----------------------------- model config (small) -----------------------------
BATCH = 2
SEQ = 8
INPUT_DIM = 16
HIDDEN_DIM = 32
LAYER_DIM = 2          # wavefront kernel below is written for a fixed 2-layer stack
OUTPUT_DIM = 8
DROPOUT_PROB = 0.0

SUBLANE = 8
LANE = 128


def _hp_dot(a, b):
    # Full-f32 matmul in the XLA wrapper / reference (avoid default bf16 passes).
    return jnp.dot(a, b, precision=jax.lax.Precision.HIGHEST)


# --------------------------------- Pallas kernel --------------------------------
def lstm_wavefront_kernel(a_ref,     # (T+1, Bp, 8H) per-wave additive gate term
                          w_ref,     # (2H, 8H)      combined recurrent weight
                          wfc_ref,   # (H, Op)       fc weight (transposed, lane-padded)
                          bfc_ref,   # (1, Op)       fc bias (lane-padded)
                          out_ref):  # (Bp, Op)      output
    n_waves, bp, _ = a_ref.shape     # n_waves = T + 1
    two_h = w_ref.shape[0]
    h = two_h // 2

    w = w_ref[...]                                            # (2H, 8H), hoisted load
    hcat = jnp.zeros((bp, two_h), jnp.float32)                # [h0 | h1]
    ccat = jnp.zeros((bp, two_h), jnp.float32)                # [c0 | c1]
    layer0_cols = lax.broadcasted_iota(jnp.int32, (bp, two_h), 1) < h

    # Wave s: layer-0 step at time s (s < T) and layer-1 step at time s-1 (s >= 1),
    # both driven by ONE matmul on the concatenated state.  Statically unrolled.
    for s in range(n_waves):
        z = a_ref[s] + jnp.dot(hcat, w, preferred_element_type=jnp.float32)  # (Bp, 8H)
        # Full-width transcendentals, then slice.  Gate column layout:
        # [i0,i1 | f0,f1 | g0,g1 | o0,o1], each block H wide.
        sg = jax.nn.sigmoid(z)
        th = jnp.tanh(z)
        i_g = sg[:, 0 * two_h:1 * two_h]
        f_g = sg[:, 1 * two_h:2 * two_h]
        g_g = th[:, 2 * two_h:3 * two_h]
        o_g = sg[:, 3 * two_h:4 * two_h]
        c_new = f_g * ccat + i_g * g_g
        h_new = o_g * jnp.tanh(c_new)
        if s == 0:
            # Wave 0 has no valid layer-1 step (it would consume y0 at t = -1):
            # keep the layer-0 half, reset the layer-1 half of the state to zero.
            ccat = jnp.where(layer0_cols, c_new, 0.0)
            hcat = jnp.where(layer0_cols, h_new, 0.0)
        else:
            ccat = c_new
            hcat = h_new
        # (At wave s == T the layer-0 half computes a padded/garbage step; it is never
        #  read again — only the layer-1 half feeds the fc head.)

    h_top = hcat[:, h:]                                       # top-layer h at last timestep
    out_ref[...] = (jnp.dot(h_top, wfc_ref[...], preferred_element_type=jnp.float32)
                    + bfc_ref[...])


# ----------------------------------- wrapper -------------------------------------
def recurrent_nn_forward(x, params):
    """x: (B, T, D) float32 (PyTorch batch_first layout). Returns (B, OUTPUT_DIM)."""
    assert LAYER_DIM == 2, "wavefront kernel is specialized for a 2-layer LSTM stack"
    B, T, D = x.shape
    H = params["whh0"].shape[0]
    O = params["wfc"].shape[1]

    Bp = ((B + SUBLANE - 1) // SUBLANE) * SUBLANE             # pad batch to full sublanes
    Op = ((O + LANE - 1) // LANE) * LANE                      # pad fc output to full lanes

    # Time-major, batch-padded input; layer-0 input projection hoisted to one XLA matmul.
    x_p = jnp.pad(x, ((0, Bp - B), (0, 0), (0, 0)))
    x_tm = jnp.transpose(x_p, (1, 0, 2))                      # (T, Bp, D)
    zx0 = (_hp_dot(x_tm.reshape(T * Bp, D), params["wih0"]).reshape(T, Bp, 4 * H)
           + params["b0"])                                    # (T, Bp, 4H)
    zx0 = jnp.concatenate([zx0, jnp.zeros((1, Bp, 4 * H), jnp.float32)], axis=0)  # wave T pad
    b1b = jnp.broadcast_to(params["b1"], (T + 1, Bp, 4 * H))

    # Per-wave additive gate term, gate-interleaved columns [i0,i1,f0,f1,g0,g1,o0,o1].
    A = jnp.concatenate(
        [jnp.concatenate([zx0[..., g * H:(g + 1) * H], b1b[..., g * H:(g + 1) * H]], axis=-1)
         for g in range(4)], axis=-1)                         # (T+1, Bp, 8H)

    # Combined recurrent weight (2H, 8H): rows 0:H multiply h0 (feeds Whh0 and Wih1),
    # rows H:2H multiply h1 (feeds Whh1).  Columns match A's gate-interleaved layout.
    zeros_hh = jnp.zeros((H, H), jnp.float32)
    blocks = []
    for g in range(4):
        top = jnp.concatenate([params["whh0"][:, g * H:(g + 1) * H],
                               params["wih1"][:, g * H:(g + 1) * H]], axis=1)   # (H, 2H)
        bot = jnp.concatenate([zeros_hh,
                               params["whh1"][:, g * H:(g + 1) * H]], axis=1)   # (H, 2H)
        blocks.append(jnp.concatenate([top, bot], axis=0))                      # (2H, 2H)
    w_rec = jnp.concatenate(blocks, axis=1)                                     # (2H, 8H)

    wfc_p = jnp.zeros((H, Op), jnp.float32).at[:, :O].set(params["wfc"])
    bfc_p = jnp.zeros((1, Op), jnp.float32).at[:, :O].set(params["bfc"])

    vmem = pl.BlockSpec(memory_space=pltpu.MemorySpace.VMEM)
    out_p = pl.pallas_call(
        lstm_wavefront_kernel,
        out_shape=jax.ShapeDtypeStruct((Bp, Op), jnp.float32),
        in_specs=[vmem] * 4,
        out_specs=vmem,
    )(A, w_rec, wfc_p, bfc_p)
    return out_p[:B, :O]


# ------------------------------ pure-JAX reference ------------------------------
def recurrent_nn_reference(x, params):
    B, T, _ = x.shape
    seq = x
    for l in range(LAYER_DIM):
        wih, whh, b = params[f"wih{l}"], params[f"whh{l}"], params[f"b{l}"]
        H = whh.shape[0]
        h = jnp.zeros((B, H), jnp.float32)
        c = jnp.zeros((B, H), jnp.float32)
        outs = []
        for t in range(T):
            z = _hp_dot(seq[:, t, :], wih) + _hp_dot(h, whh) + b
            i_g = jax.nn.sigmoid(z[:, 0 * H:1 * H])
            f_g = jax.nn.sigmoid(z[:, 1 * H:2 * H])
            g_g = jnp.tanh(z[:, 2 * H:3 * H])
            o_g = jax.nn.sigmoid(z[:, 3 * H:4 * H])
            c = f_g * c + i_g * g_g
            h = o_g * jnp.tanh(c)
            outs.append(h)
        seq = jnp.stack(outs, axis=1)
    return _hp_dot(seq[:, -1, :], params["wfc"]) + params["bfc"]


# --------------------------------- param init -----------------------------------
def init_params(key):
    """Deterministic init matching PyTorch LSTM/Linear shapes (uniform(-1/sqrt(H), 1/sqrt(H)))."""
    k = 1.0 / jnp.sqrt(HIDDEN_DIM)
    keys = jax.random.split(key, 12)
    u = lambda kk, shape: jax.random.uniform(kk, shape, jnp.float32, -k, k)

    params = {}
    # layer 0 (input_dim -> hidden_dim); PyTorch weights are (4H, D_in): transpose for kernel.
    params["wih0"] = u(keys[0], (4 * HIDDEN_DIM, INPUT_DIM)).T
    params["whh0"] = u(keys[1], (4 * HIDDEN_DIM, HIDDEN_DIM)).T
    params["b0"] = (u(keys[2], (4 * HIDDEN_DIM,)) + u(keys[3], (4 * HIDDEN_DIM,)))[None, :]
    # layer 1 (hidden_dim -> hidden_dim)
    params["wih1"] = u(keys[4], (4 * HIDDEN_DIM, HIDDEN_DIM)).T
    params["whh1"] = u(keys[5], (4 * HIDDEN_DIM, HIDDEN_DIM)).T
    params["b1"] = (u(keys[6], (4 * HIDDEN_DIM,)) + u(keys[7], (4 * HIDDEN_DIM,)))[None, :]
    # fc head: nn.Linear(hidden_dim, output_dim): weight (O, H) -> transpose.
    params["wfc"] = u(keys[8], (OUTPUT_DIM, HIDDEN_DIM)).T
    params["bfc"] = u(keys[9], (OUTPUT_DIM,))[None, :]
    return params


if __name__ == "__main__":
    key = jax.random.PRNGKey(0)
    k_x, k_p = jax.random.split(key)
    x = jax.random.normal(k_x, (BATCH, SEQ, INPUT_DIM), jnp.float32)
    params = init_params(k_p)

    out = recurrent_nn_forward(x, params)
    out = jax.block_until_ready(out)

    ref = recurrent_nn_reference(x, params)
    assert out.shape == (BATCH, OUTPUT_DIM)
    assert jnp.allclose(out, ref, atol=1e-4, rtol=1e-4), "kernel/reference mismatch"

    # TODO(synk): `step()` / softmax-argmax sampling and data_handler are host-side
    # utilities, not part of the tensor forward pass, and are intentionally not kernelized.
    print("KERNEL_OK")
</pallas_src>

<mosaic_0001>
module attributes {stable_mosaic.version = 11 : i64} {
  func.func @lstm_wavefront_kernel(%arg0: memref<9x8x256xf32, #tpu.memory_space<vmem>>, %arg1: memref<64x256xf32, #tpu.memory_space<vmem>>, %arg2: memref<32x128xf32, #tpu.memory_space<vmem>>, %arg3: memref<1x128xf32, #tpu.memory_space<vmem>>, %arg4: memref<8x128xf32, #tpu.memory_space<vmem>>) attributes {dimension_semantics = [], scalar_prefetch = 0 : i64, scratch_operands = 0 : i64, tpu.core_type = #tpu.core_type<tc>} {
    %c0 = arith.constant 0 : index
    %c0_0 = arith.constant 0 : index
    %0 = vector.load %arg1[%c0, %c0_0] : memref<64x256xf32, #tpu.memory_space<vmem>>, vector<64x256xf32>
    %cst = arith.constant 0.000000e+00 : f32
    %1 = vector.broadcast %cst : f32 to vector<8x64xf32>
    %cst_1 = arith.constant 0.000000e+00 : f32
    %2 = vector.broadcast %cst_1 : f32 to vector<8x64xf32>
    %3 = tpu.iota {dimensions = array<i32: 1>} : vector<8x64xi32>
    %c32_i32 = arith.constant 32 : i32
    %4 = vector.broadcast %c32_i32 : i32 to vector<8x64xi32>
    %5 = arith.cmpi slt, %3, %4 : vector<8x64xi32>
    %c0_2 = arith.constant 0 : index
    %c0_3 = arith.constant 0 : index
    %c0_4 = arith.constant 0 : index
    %6 = vector.load %arg0[%c0_2, %c0_3, %c0_4] : memref<9x8x256xf32, #tpu.memory_space<vmem>>, vector<1x8x256xf32>
    %7 = vector.shape_cast %6 : vector<1x8x256xf32> to vector<8x256xf32>
    %cst_5 = arith.constant dense<0.000000e+00> : vector<8x256xf32>
    %8 = tpu.matmul %1, %0, %cst_5 {dimension_numbers = #tpu.dot_dimension_numbers<[1], [0], [0], [1], [0, 0, 1, 1], [], []>} : vector<8x64xf32>, vector<64x256xf32>, vector<8x256xf32> -> vector<8x256xf32>
    %9 = arith.addf %7, %8 : vector<8x256xf32>
    %10 = arith.negf %9 : vector<8x256xf32>
    %11 = math.exp %10 : vector<8x256xf32>
    %cst_6 = arith.constant 1.000000e+00 : f32
    %12 = vector.broadcast %cst_6 : f32 to vector<8x256xf32>
    %13 = arith.addf %12, %11 : vector<8x256xf32>
    %14 = arith.divf %12, %13 : vector<8x256xf32>
    %15 = math.tanh %9 : vector<8x256xf32>
    %16 = vector.extract_strided_slice %14 {offsets = [0, 0], sizes = [8, 64], strides = [1, 1]} : vector<8x256xf32> to vector<8x64xf32>
    %17 = vector.extract_strided_slice %14 {offsets = [0, 64], sizes = [8, 64], strides = [1, 1]} : vector<8x256xf32> to vector<8x64xf32>
    %18 = vector.extract_strided_slice %15 {offsets = [0, 128], sizes = [8, 64], strides = [1, 1]} : vector<8x256xf32> to vector<8x64xf32>
    %19 = vector.extract_strided_slice %14 {offsets = [0, 192], sizes = [8, 64], strides = [1, 1]} : vector<8x256xf32> to vector<8x64xf32>
    %20 = arith.mulf %17, %2 : vector<8x64xf32>
    %21 = arith.mulf %16, %18 : vector<8x64xf32>
    %22 = arith.addf %20, %21 : vector<8x64xf32>
    %23 = math.tanh %22 : vector<8x64xf32>
    %24 = arith.mulf %19, %23 : vector<8x64xf32>
    %cst_7 = arith.constant 0.000000e+00 : f32
    %25 = vector.broadcast %cst_7 : f32 to vector<8x64xf32>
    %26 = arith.select %5, %22, %25 : vector<8x64xi1>, vector<8x64xf32>
    %cst_8 = arith.constant 0.000000e+00 : f32
    %27 = vector.broadcast %cst_8 : f32 to vector<8x64xf32>
    %28 = arith.select %5, %24, %27 : vector<8x64xi1>, vector<8x64xf32>
    %c1 = arith.constant 1 : index
    %c0_9 = arith.constant 0 : index
    %c0_10 = arith.constant 0 : index
    %29 = vector.load %arg0[%c1, %c0_9, %c0_10] : memref<9x8x256xf32, #tpu.memory_space<vmem>>, vector<1x8x256xf32>
    %30 = vector.shape_cast %29 : vector<1x8x256xf32> to vector<8x256xf32>
    %cst_11 = arith.constant dense<0.000000e+00> : vector<8x256xf32>
    %31 = tpu.matmul %28, %0, %cst_11 {dimension_numbers = #tpu.dot_dimension_numbers<[1], [0], [0], [1], [0, 0, 1, 1], [], []>} : vector<8x64xf32>, vector<64x256xf32>, vector<8x256xf32> -> vector<8x256xf32>
    %32 = arith.addf %30, %31 : vector<8x256xf32>
    %33 = arith.negf %32 : vector<8x256xf32>
    %34 = math.exp %33 : vector<8x256xf32>
    %cst_12 = arith.constant 1.000000e+00 : f32
    %35 = vector.broadcast %cst_12 : f32 to vector<8x256xf32>
    %36 = arith.addf %35, %34 : vector<8x256xf32>
    %37 = arith.divf %35, %36 : vector<8x256xf32>
    %38 = math.tanh %32 : vector<8x256xf32>
    %39 = vector.extract_strided_slice %37 {offsets = [0, 0], sizes = [8, 64], strides = [1, 1]} : vector<8x256xf32> to vector<8x64xf32>
    %40 = vector.extract_strided_slice %37 {offsets = [0, 64], sizes = [8, 64], strides = [1, 1]} : vector<8x256xf32> to vector<8x64xf32>
    %41 = vector.extract_strided_slice %38 {offsets = [0, 128], sizes = [8, 64], strides = [1, 1]} : vector<8x256xf32> to vector<8x64xf32>
    %42 = vector.extract_strided_slice %37 {offsets = [0, 192], sizes = [8, 64], strides = [1, 1]} : vector<8x256xf32> to vector<8x64xf32>
    %43 = arith.mulf %40, %26 : vector<8x64xf32>
    %44 = arith.mulf %39, %41 : vector<8x64xf32>
    %45 = arith.addf %43, %44 : vector<8x64xf32>
    %46 = math.tanh %45 : vector<8x64xf32>
    %47 = arith.mulf %42, %46 : vector<8x64xf32>
    %c2 = arith.constant 2 : index
    %c0_13 = arith.constant 0 : index
    %c0_14 = arith.constant 0 : index
    %48 = vector.load %arg0[%c2, %c0_13, %c0_14] : memref<9x8x256xf32, #tpu.memory_space<vmem>>, vector<1x8x256xf32>
    %49 = vector.shape_cast %48 : vector<1x8x256xf32> to vector<8x256xf32>
    %cst_15 = arith.constant dense<0.000000e+00> : vector<8x256xf32>
    %50 = tpu.matmul %47, %0, %cst_15 {dimension_numbers = #tpu.dot_dimension_numbers<[1], [0], [0], [1], [0, 0, 1, 1], [], []>} : vector<8x64xf32>, vector<64x256xf32>, vector<8x256xf32> -> vector<8x256xf32>
    %51 = arith.addf %49, %50 : vector<8x256xf32>
    %52 = arith.negf %51 : vector<8x256xf32>
    %53 = math.exp %52 : vector<8x256xf32>
    %cst_16 = arith.constant 1.000000e+00 : f32
    %54 = vector.broadcast %cst_16 : f32 to vector<8x256xf32>
    %55 = arith.addf %54, %53 : vector<8x256xf32>
    %56 = arith.divf %54, %55 : vector<8x256xf32>
    %57 = math.tanh %51 : vector<8x256xf32>
    %58 = vector.extract_strided_slice %56 {offsets = [0, 0], sizes = [8, 64], strides = [1, 1]} : vector<8x256xf32> to vector<8x64xf32>
    %59 = vector.extract_strided_slice %56 {offsets = [0, 64], sizes = [8, 64], strides = [1, 1]} : vector<8x256xf32> to vector<8x64xf32>
    %60 = vector.extract_strided_slice %57 {offsets = [0, 128], sizes = [8, 64], strides = [1, 1]} : vector<8x256xf32> to vector<8x64xf32>
    %61 = vector.extract_strided_slice %56 {offsets = [0, 192], sizes = [8, 64], strides = [1, 1]} : vector<8x256xf32> to vector<8x64xf32>
    %62 = arith.mulf %59, %45 : vector<8x64xf32>
    %63 = arith.mulf %58, %60 : vector<8x64xf32>
    %64 = arith.addf %62, %63 : vector<8x64xf32>
    %65 = math.tanh %64 : vector<8x64xf32>
    %66 = arith.mulf %61, %65 : vector<8x64xf32>
    %c3 = arith.constant 3 : index
    %c0_17 = arith.constant 0 : index
    %c0_18 = arith.constant 0 : index
    %67 = vector.load %arg0[%c3, %c0_17, %c0_18] : memref<9x8x256xf32, #tpu.memory_space<vmem>>, vector<1x8x256xf32>
    %68 = vector.shape_cast %67 : vector<1x8x256xf32> to vector<8x256xf32>
    %cst_19 = arith.constant dense<0.000000e+00> : vector<8x256xf32>
    %69 = tpu.matmul %66, %0, %cst_19 {dimension_numbers = #tpu.dot_dimension_numbers<[1], [0], [0], [1], [0, 0, 1, 1], [], []>} : vector<8x64xf32>, vector<64x256xf32>, vector<8x256xf32> -> vector<8x256xf32>
    %70 = arith.addf %68, %69 : vector<8x256xf32>
    %71 = arith.negf %70 : vector<8x256xf32>
    %72 = math.exp %71 : vector<8x256xf32>
    %cst_20 = arith.constant 1.000000e+00 : f32
    %73 = vector.broadcast %cst_20 : f32 to vector<8x256xf32>
    %74 = arith.addf %73, %72 : vector<8x256xf32>
    %75 = arith.divf %73, %74 : vector<8x256xf32>
    %76 = math.tanh %70 : vector<8x256xf32>
    %77 = vector.extract_strided_slice %75 {offsets = [0, 0], sizes = [8, 64], strides = [1, 1]} : vector<8x256xf32> to vector<8x64xf32>
    %78 = vector.extract_strided_slice %75 {offsets = [0, 64], sizes = [8, 64], strides = [1, 1]} : vector<8x256xf32> to vector<8x64xf32>
    %79 = vector.extract_strided_slice %76 {offsets = [0, 128], sizes = [8, 64], strides = [1, 1]} : vector<8x256xf32> to vector<8x64xf32>
    %80 = vector.extract_strided_slice %75 {offsets = [0, 192], sizes = [8, 64], strides = [1, 1]} : vector<8x256xf32> to vector<8x64xf32>
    %81 = arith.mulf %78, %64 : vector<8x64xf32>
    %82 = arith.mulf %77, %79 : vector<8x64xf32>
    %83 = arith.addf %81, %82 : vector<8x64xf32>
    %84 = math.tanh %83 : vector<8x64xf32>
    %85 = arith.mulf %80, %84 : vector<8x64xf32>
    %c4 = arith.constant 4 : index
    %c0_21 = arith.constant 0 : index
    %c0_22 = arith.constant 0 : index
    %86 = vector.load %arg0[%c4, %c0_21, %c0_22] : memref<9x8x256xf32, #tpu.memory_space<vmem>>, vector<1x8x256xf32>
    %87 = vector.shape_cast %86 : vector<1x8x256xf32> to vector<8x256xf32>
    %cst_23 = arith.constant dense<0.000000e+00> : vector<8x256xf32>
    %88 = tpu.matmul %85, %0, %cst_23 {dimension_numbers = #tpu.dot_dimension_numbers<[1], [0], [0], [1], [0, 0, 1, 1], [], []>} : vector<8x64xf32>, vector<64x256xf32>, vector<8x256xf32> -> vector<8x256xf32>
    %89 = arith.addf %87, %88 : vector<8x256xf32>
    %90 = arith.negf %89 : vector<8x256xf32>
    %91 = math.exp %90 : vector<8x256xf32>
    %cst_24 = arith.constant 1.000000e+00 : f32
    %92 = vector.broadcast %cst_24 : f32 to vector<8x256xf32>
    %93 = arith.addf %92, %91 : vector<8x256xf32>
    %94 = arith.divf %92, %93 : vector<8x256xf32>
    %95 = math.tanh %89 : vector<8x256xf32>
    %96 = vector.extract_strided_slice %94 {offsets = [0, 0], sizes = [8, 64], strides = [1, 1]} : vector<8x256xf32> to vector<8x64xf32>
    %97 = vector.extract_strided_slice %94 {offsets = [0, 64], sizes = [8, 64], strides = [1, 1]} : vector<8x256xf32> to vector<8x64xf32>
    %98 = vector.extract_strided_slice %95 {offsets = [0, 128], sizes = [8, 64], strides = [1, 1]} : vector<8x256xf32> to vector<8x64xf32>
    %99 = vector.extract_strided_slice %94 {offsets = [0, 192], sizes = [8, 64], strides = [1, 1]} : vector<8x256xf32> to vector<8x64xf32>
    %100 = arith.mulf %97, %83 : vector<8x64xf32>
    %101 = arith.mulf %96, %98 : vector<8x64xf32>
    %102 = arith.addf %100, %101 : vector<8x64xf32>
    %103 = math.tanh %102 : vector<8x64xf32>
    %104 = arith.mulf %99, %103 : vector<8x64xf32>
    %c5 = arith.constant 5 : index
    %c0_25 = arith.constant 0 : index
    %c0_26 = arith.constant 0 : index
    %105 = vector.load %arg0[%c5, %c0_25, %c0_26] : memref<9x8x256xf32, #tpu.memory_space<vmem>>, vector<1x8x256xf32>
    %106 = vector.shape_cast %105 : vector<1x8x256xf32> to vector<8x256xf32>
    %cst_27 = arith.constant dense<0.000000e+00> : vector<8x256xf32>
    %107 = tpu.matmul %104, %0, %cst_27 {dimension_numbers = #tpu.dot_dimension_numbers<[1], [0], [0], [1], [0, 0, 1, 1], [], []>} : vector<8x64xf32>, vector<64x256xf32>, vector<8x256xf32> -> vector<8x256xf32>
    %108 = arith.addf %106, %107 : vector<8x256xf32>
    %109 = arith.negf %108 : vector<8x256xf32>
    %110 = math.exp %109 : vector<8x256xf32>
    %cst_28 = arith.constant 1.000000e+00 : f32
    %111 = vector.broadcast %cst_28 : f32 to vector<8x256xf32>
    %112 = arith.addf %111, %110 : vector<8x256xf32>
    %113 = arith.divf %111, %112 : vector<8x256xf32>
    %114 = math.tanh %108 : vector<8x256xf32>
    %115 = vector.extract_strided_slice %113 {offsets = [0, 0], sizes = [8, 64], strides = [1, 1]} : vector<8x256xf32> to vector<8x64xf32>
    %116 = vector.extract_strided_slice %113 {offsets = [0, 64], sizes = [8, 64], strides = [1, 1]} : vector<8x256xf32> to vector<8x64xf32>
    %117 = vector.extract_strided_slice %114 {offsets = [0, 128], sizes = [8, 64], strides = [1, 1]} : vector<8x256xf32> to vector<8x64xf32>
    %118 = vector.extract_strided_slice %113 {offsets = [0, 192], sizes = [8, 64], strides = [1, 1]} : vector<8x256xf32> to vector<8x64xf32>
    %119 = arith.mulf %116, %102 : vector<8x64xf32>
    %120 = arith.mulf %115, %117 : vector<8x64xf32>
    %121 = arith.addf %119, %120 : vector<8x64xf32>
    %122 = math.tanh %121 : vector<8x64xf32>
    %123 = arith.mulf %118, %122 : vector<8x64xf32>
    %c6 = arith.constant 6 : index
    %c0_29 = arith.constant 0 : index
    %c0_30 = arith.constant 0 : index
    %124 = vector.load %arg0[%c6, %c0_29, %c0_30] : memref<9x8x256xf32, #tpu.memory_space<vmem>>, vector<1x8x256xf32>
    %125 = vector.shape_cast %124 : vector<1x8x256xf32> to vector<8x256xf32>
    %cst_31 = arith.constant dense<0.000000e+00> : vector<8x256xf32>
    %126 = tpu.matmul %123, %0, %cst_31 {dimension_numbers = #tpu.dot_dimension_numbers<[1], [0], [0], [1], [0, 0, 1, 1], [], []>} : vector<8x64xf32>, vector<64x256xf32>, vector<8x256xf32> -> vector<8x256xf32>
    %127 = arith.addf %125, %126 : vector<8x256xf32>
    %128 = arith.negf %127 : vector<8x256xf32>
    %129 = math.exp %128 : vector<8x256xf32>
    %cst_32 = arith.constant 1.000000e+00 : f32
    %130 = vector.broadcast %cst_32 : f32 to vector<8x256xf32>
    %131 = arith.addf %130, %129 : vector<8x256xf32>
    %132 = arith.divf %130, %131 : vector<8x256xf32>
    %133 = math.tanh %127 : vector<8x256xf32>
    %134 = vector.extract_strided_slice %132 {offsets = [0, 0], sizes = [8, 64], strides = [1, 1]} : vector<8x256xf32> to vector<8x64xf32>
    %135 = vector.extract_strided_slice %132 {offsets = [0, 64], sizes = [8, 64], strides = [1, 1]} : vector<8x256xf32> to vector<8x64xf32>
    %136 = vector.extract_strided_slice %133 {offsets = [0, 128], sizes = [8, 64], strides = [1, 1]} : vector<8x256xf32> to vector<8x64xf32>
    %137 = vector.extract_strided_slice %132 {offsets = [0, 192], sizes = [8, 64], strides = [1, 1]} : vector<8x256xf32> to vector<8x64xf32>
    %138 = arith.mulf %135, %121 : vector<8x64xf32>
    %139 = arith.mulf %134, %136 : vector<8x64xf32>
    %140 = arith.addf %138, %139 : vector<8x64xf32>
    %141 = math.tanh %140 : vector<8x64xf32>
    %142 = arith.mulf %137, %141 : vector<8x64xf32>
    %c7 = arith.constant 7 : index
    %c0_33 = arith.constant 0 : index
    %c0_34 = arith.constant 0 : index
    %143 = vector.load %arg0[%c7, %c0_33, %c0_34] : memref<9x8x256xf32, #tpu.memory_space<vmem>>, vector<1x8x256xf32>
    %144 = vector.shape_cast %143 : vector<1x8x256xf32> to vector<8x256xf32>
    %cst_35 = arith.constant dense<0.000000e+00> : vector<8x256xf32>
    %145 = tpu.matmul %142, %0, %cst_35 {dimension_numbers = #tpu.dot_dimension_numbers<[1], [0], [0], [1], [0, 0, 1, 1], [], []>} : vector<8x64xf32>, vector<64x256xf32>, vector<8x256xf32> -> vector<8x256xf32>
    %146 = arith.addf %144, %145 : vector<8x256xf32>
    %147 = arith.negf %146 : vector<8x256xf32>
    %148 = math.exp %147 : vector<8x256xf32>
    %cst_36 = arith.constant 1.000000e+00 : f32
    %149 = vector.broadcast %cst_36 : f32 to vector<8x256xf32>
    %150 = arith.addf %149, %148 : vector<8x256xf32>
    %151 = arith.divf %149, %150 : vector<8x256xf32>
    %152 = math.tanh %146 : vector<8x256xf32>
    %153 = vector.extract_strided_slice %151 {offsets = [0, 0], sizes = [8, 64], strides = [1, 1]} : vector<8x256xf32> to vector<8x64xf32>
    %154 = vector.extract_strided_slice %151 {offsets = [0, 64], sizes = [8, 64], strides = [1, 1]} : vector<8x256xf32> to vector<8x64xf32>
    %155 = vector.extract_strided_slice %152 {offsets = [0, 128], sizes = [8, 64], strides = [1, 1]} : vector<8x256xf32> to vector<8x64xf32>
    %156 = vector.extract_strided_slice %151 {offsets = [0, 192], sizes = [8, 64], strides = [1, 1]} : vector<8x256xf32> to vector<8x64xf32>
    %157 = arith.mulf %154, %140 : vector<8x64xf32>
    %158 = arith.mulf %153, %155 : vector<8x64xf32>
    %159 = arith.addf %157, %158 : vector<8x64xf32>
    %160 = math.tanh %159 : vector<8x64xf32>
    %161 = arith.mulf %156, %160 : vector<8x64xf32>
    %c8 = arith.constant 8 : index
    %c0_37 = arith.constant 0 : index
    %c0_38 = arith.constant 0 : index
    %162 = vector.load %arg0[%c8, %c0_37, %c0_38] : memref<9x8x256xf32, #tpu.memory_space<vmem>>, vector<1x8x256xf32>
    %163 = vector.shape_cast %162 : vector<1x8x256xf32> to vector<8x256xf32>
    %cst_39 = arith.constant dense<0.000000e+00> : vector<8x256xf32>
    %164 = tpu.matmul %161, %0, %cst_39 {dimension_numbers = #tpu.dot_dimension_numbers<[1], [0], [0], [1], [0, 0, 1, 1], [], []>} : vector<8x64xf32>, vector<64x256xf32>, vector<8x256xf32> -> vector<8x256xf32>
    %165 = arith.addf %163, %164 : vector<8x256xf32>
    %166 = arith.negf %165 : vector<8x256xf32>
    %167 = math.exp %166 : vector<8x256xf32>
    %cst_40 = arith.constant 1.000000e+00 : f32
    %168 = vector.broadcast %cst_40 : f32 to vector<8x256xf32>
    %169 = arith.addf %168, %167 : vector<8x256xf32>
    %170 = arith.divf %168, %169 : vector<8x256xf32>
    %171 = math.tanh %165 : vector<8x256xf32>
    %172 = vector.extract_strided_slice %170 {offsets = [0, 0], sizes = [8, 64], strides = [1, 1]} : vector<8x256xf32> to vector<8x64xf32>
    %173 = vector.extract_strided_slice %170 {offsets = [0, 64], sizes = [8, 64], strides = [1, 1]} : vector<8x256xf32> to vector<8x64xf32>
    %174 = vector.extract_strided_slice %171 {offsets = [0, 128], sizes = [8, 64], strides = [1, 1]} : vector<8x256xf32> to vector<8x64xf32>
    %175 = vector.extract_strided_slice %170 {offsets = [0, 192], sizes = [8, 64], strides = [1, 1]} : vector<8x256xf32> to vector<8x64xf32>
    %176 = arith.mulf %173, %159 : vector<8x64xf32>
    %177 = arith.mulf %172, %174 : vector<8x64xf32>
    %178 = arith.addf %176, %177 : vector<8x64xf32>
    %179 = math.tanh %178 : vector<8x64xf32>
    %180 = arith.mulf %175, %179 : vector<8x64xf32>
    %181 = vector.extract_strided_slice %180 {offsets = [0, 32], sizes = [8, 32], strides = [1, 1]} : vector<8x64xf32> to vector<8x32xf32>
    %c0_41 = arith.constant 0 : index
    %c0_42 = arith.constant 0 : index
    %182 = vector.load %arg2[%c0_41, %c0_42] : memref<32x128xf32, #tpu.memory_space<vmem>>, vector<32x128xf32>
    %cst_43 = arith.constant dense<0.000000e+00> : vector<8x128xf32>
    %183 = tpu.matmul %181, %182, %cst_43 {dimension_numbers = #tpu.dot_dimension_numbers<[1], [0], [0], [1], [0, 0, 1, 1], [], []>} : vector<8x32xf32>, vector<32x128xf32>, vector<8x128xf32> -> vector<8x128xf32>
    %c0_44 = arith.constant 0 : index
    %c0_45 = arith.constant 0 : index
    %184 = vector.load %arg3[%c0_44, %c0_45] : memref<1x128xf32, #tpu.memory_space<vmem>>, vector<1x128xf32>
    %185 = vector.broadcast %184 : vector<1x128xf32> to vector<8x128xf32>
    %186 = arith.addf %183, %185 : vector<8x128xf32>
    %c0_46 = arith.constant 0 : index
    %c0_47 = arith.constant 0 : index
    %187 = vector.load %arg4[%c0_46, %c0_47] : memref<8x128xf32, #tpu.memory_space<vmem>>, vector<8x128xf32>
    tpu.vector_store %arg4[%c0_46, %c0_47], %186 {strides = array<i32>} : memref<8x128xf32, #tpu.memory_space<vmem>>, vector<8x128xf32>,
    return
  }
}

</mosaic_0001>

<llo_original>
// kernel: tpu_custom_call.1
$region0: #{tpu_custom_call.1}
  #allocation0 [shape = 'u32[]', space=smem, size = 0x4, offset = 0x4, fixed_abs, tag = 'smem constant byte address 0x4 - core index']
  #allocation1 [shape = 'u32[144,128]{1,0:T(1,128)}', space=vmem, size = 0x12000, scoped, tag = 'internal scratch']
  %s0 = inlined_call_operand.hbm [shape: f32[9,8,256], index: 0, kind: input, shape index: {}]
  %s1 = inlined_call_operand.hbm [shape: f32[64,256], index: 1, kind: input, shape index: {}]
  %s2 = inlined_call_operand.hbm [shape: f32[32,128], index: 2, kind: input, shape index: {}]
  %s3 = inlined_call_operand.vmem [shape: f32[1,128], index: 3, kind: input, shape index: {}]
  %s4 = inlined_call_operand.hbm [shape: f32[8,128], index: 4, kind: output, shape index: {}]
  %s5 = sld [smem:[#allocation0]]
  $region38: #{tpu_custom_call.1} parent=0
    _
  %s7 = ssub.s32 1, %s5
  %s8 = scalar_select 0, %s7, %s5
  $region1: #{tpu_custom_call.1} parent=0
    #allocation2 [shape = 'u8[73728]{0}', space=vmem, size = 0x12000, scoped, tag = 'input window, operand 0, single buffered']
    #allocation3 [shape = 's32[1]{0}', space=sflag, size = 0x4, scoped, tag = 'scoped memory for tpu_custom_call.1']
    #allocation4 [shape = 's32[1]{0}', space=sflag, size = 0x4, scoped, tag = 'scoped memory for tpu_custom_call.1']
    #allocation5 [shape = 'u8[65536]{0}', space=vmem, size = 0x10000, scoped, tag = 'input window, operand 1, single buffered']
    #allocation6 [shape = 's32[1]{0}', space=sflag, size = 0x4, scoped, tag = 'scoped memory for tpu_custom_call.1']
    #allocation7 [shape = 'u8[16384]{0}', space=vmem, size = 0x4000, scoped, tag = 'input window, operand 2, single buffered']
    #allocation8 [shape = 'u8[4096]{0}', space=vmem, size = 0x1000, scoped, tag = 'output window, operand 0, single buffered']
    %9 = vsyncpa [#allocation3], 0
    %10 = vsyncpa [#allocation6], 0
    %11 = vsyncpa [#allocation4], 0
    // Predicated region
    $region2: #{tpu_custom_call.1} parent=1 // pred_check
      _
    $region3: #{tpu_custom_call.1} parent=1 // pred_check_branch
      %13 = sbr.rel (0) target = $region5
    $region4: #{tpu_custom_call.1} parent=1 // pred_region
      %s15 = ssub.s32 2304, 2304
      %16 = vsyncadd [#allocation3], %s15
      %s17 = sshll.u32 [#allocation2], 4
      %s18 = int_to_ptr.vmem [resolvable:$true] %s17
      %23 = dma.hbm_to_vmem [thread:$0]  %s0, 2304, %s18, [#allocation3], 256, 256, 16
    $region5: #{tpu_custom_call.1} parent=1 // pred_fallthru
      _
    // Predicated region
    $region6: #{tpu_custom_call.1} parent=1 // pred_check
      _
    $region7: #{tpu_custom_call.1} parent=1 // pred_check_branch
      %25 = sbr.rel (0) target = $region9
    $region8: #{tpu_custom_call.1} parent=1 // pred_region
      %s27 = ssub.s32 2048, 2048
      %28 = vsyncadd [#allocation6], %s27
      %s29 = sshll.u32 [#allocation5], 4
      %s30 = int_to_ptr.vmem [resolvable:$true] %s29
      %35 = dma.hbm_to_vmem [thread:$0]  %s1, 2048, %s30, [#allocation6], 256, 256, 16
    $region9: #{tpu_custom_call.1} parent=1 // pred_fallthru
      _
    // Predicated region
    $region10: #{tpu_custom_call.1} parent=1 // pred_check
      _
    $region11: #{tpu_custom_call.1} parent=1 // pred_check_branch
      %37 = sbr.rel (0) target = $region13
    $region12: #{tpu_custom_call.1} parent=1 // pred_region
      %s39 = ssub.s32 512, 512
      %40 = vsyncadd [#allocation6], %s39
      %s41 = sshll.u32 [#allocation7], 4
      %s42 = int_to_ptr.vmem [resolvable:$true] %s41
      %47 = dma.hbm_to_vmem [thread:$0]  %s2, 512, %s42, [#allocation6], 128, 128, 8
    $region13: #{tpu_custom_call.1} parent=1 // pred_fallthru
      _
    // Predicated region
    $region14: #{tpu_custom_call.1} parent=1 // pred_check
      _
    $region15: #{tpu_custom_call.1} parent=1 // pred_check_branch
      %49 = sbr.rel (0) target = $region17
    $region16: #{tpu_custom_call.1} parent=1 // pred_region
      _
    $region17: #{tpu_custom_call.1} parent=1 // pred_fallthru
      _
    // Predicated region
    $region18: #{tpu_custom_call.1} parent=1 // pred_check
      _
    $region19: #{tpu_custom_call.1} parent=1 // pred_check_branch
      %51 = sbr.rel (0) target = $region21
    $region20: #{tpu_custom_call.1} parent=1 // pred_region
      %52 = dma.done [#allocation3], 2304
    $region21: #{tpu_custom_call.1} parent=1 // pred_fallthru
      _
    // Predicated region
    $region22: #{tpu_custom_call.1} parent=1 // pred_check
      _
    $region23: #{tpu_custom_call.1} parent=1 // pred_check_branch
      %54 = sbr.rel (0) target = $region25
    $region24: #{tpu_custom_call.1} parent=1 // pred_region
      %55 = dma.done [#allocation6], 2048
    $region25: #{tpu_custom_call.1} parent=1 // pred_fallthru
      _
    // Predicated region
    $region26: #{tpu_custom_call.1} parent=1 // pred_check
      _
    $region27: #{tpu_custom_call.1} parent=1 // pred_check_branch
      %57 = sbr.rel (0) target = $region29
    $region28: #{tpu_custom_call.1} parent=1 // pred_region
      %58 = dma.done [#allocation6], 512
    $region29: #{tpu_custom_call.1} parent=1 // pred_fallthru
      _
    %v59 = vld [vmem:[#allocation5] sm:$0xff]
    %v60 = vld [vmem:[#allocation5 + $0x8] sm:$0xff]
    %v61 = vld [vmem:[#allocation5 + $0x10] sm:$0xff]
    %v62 = vld [vmem:[#allocation5 + $0x18] sm:$0xff]
    %v63 = vld [vmem:[#allocation5 + $0x20] sm:$0xff]
    %v64 = vld [vmem:[#allocation5 + $0x28] sm:$0xff]
    %v65 = vld [vmem:[#allocation5 + $0x30] sm:$0xff]
    %v66 = vld [vmem:[#allocation5 + $0x38] sm:$0xff]
    %v67 = vld [vmem:[#allocation5 + $0x40] sm:$0xff]
    %v68 = vld [vmem:[#allocation5 + $0x48] sm:$0xff]
    %v69 = vld [vmem:[#allocation5 + $0x50] sm:$0xff]
    %v70 = vld [vmem:[#allocation5 + $0x58] sm:$0xff]
    %v71 = vld [vmem:[#allocation5 + $0x60] sm:$0xff]
    %v72 = vld [vmem:[#allocation5 + $0x68] sm:$0xff]
    %v73 = vld [vmem:[#allocation5 + $0x70] sm:$0xff]
    %v74 = vld [vmem:[#allocation5 + $0x78] sm:$0xff]
    %v75 = vlaneseq
    %v76 = vand.u32 %v75, 127
    %vm77 = vcmp.lt.s32.totalorder %v76, 32
    %v78 = vld [vmem:[#allocation2] sm:$0xff]
    %v79 = vld [vmem:[#allocation2 + $0x8] sm:$0xff]
    %vm80 = vcmask 523264
    %v82 = vsel %vm80, 0.0, 0
    %84 = vmatprep.subr.mxu0 0.0
    %85 = vmatpush1.msra.mxu0 0.0
    %86 = vmatprep.subr.mxu0 0.0
    %87 = vmatpush1.msra.mxu0 0.0
    %88 = vmatprep.subr.mxu0 0.0
    %89 = vmatpush1.msra.mxu0 0.0
    %90 = vmatprep.subr.mxu0 0.0
    %91 = vmatpush1.msra.mxu0 0.0
    %92 = vmatprep.subr.mxu0 0.0
    %93 = vmatpush1.msra.mxu0 0.0
    %94 = vmatprep.subr.mxu0 0.0
    %95 = vmatpush1.msra.mxu0 0.0
    %96 = vmatprep.subr.mxu0 0.0
    %97 = vmatpush1.msra.mxu0 0.0
    %98 = vmatprep.subr.mxu0 0.0
    %99 = vmatpush1.msra.mxu0 0.0
    %100 = vmatprep.subr.mxu0 %v74
    %101 = vmatpush1.msra.mxu0 %v73
    %102 = vmatprep.subr.mxu0 %v72
    %103 = vmatpush1.msra.mxu0 %v71
    %104 = vmatprep.subr.mxu0 %v70
    %105 = vmatpush1.msra.mxu0 %v69
    %106 = vmatprep.subr.mxu0 %v68
    %107 = vmatpush1.msra.mxu0 %v67
    %108 = vmatprep.subr.mxu0 %v66
    %109 = vmatpush1.msra.mxu0 %v65
    %110 = vmatprep.subr.mxu0 %v64
    %111 = vmatpush1.msra.mxu0 %v63
    %112 = vmatprep.subr.mxu0 %v62
    %113 = vmatpush1.msra.mxu0 %v61
    %114 = vmatprep.subr.mxu0 %v60
    %115 = vmatpush1.msra.mxu0 %v59
    %116 = vmatprep.subr.mxu0 0.0
    %117 = vmatpush2.msra.mxu0 0.0
    %118 = vmatprep.subr.mxu0 0.0
    %119 = vmatpush2.msra.mxu0 0.0
    %120 = vmatprep.subr.mxu0 0.0
    %121 = vmatpush2.msra.mxu0 0.0
    %122 = vmatprep.subr.mxu0 0.0
    %123 = vmatpush2.msra.mxu0 0.0
    %124 = vmatprep.subr.mxu0 0.0
    %125 = vmatpush2.msra.mxu0 0.0
    %126 = vmatprep.subr.mxu0 0.0
    %127 = vmatpush2.msra.mxu0 0.0
    %128 = vmatprep.subr.mxu0 0.0
    %129 = vmatpush2.msra.mxu0 0.0
    %130 = vmatprep.subr.mxu0 0.0
    %131 = vmatpush2.msra.mxu0 0.0
    %132 = vmatprep.subr.mxu0 0.0
    %133 = vmatpush2.msra.mxu0 0.0
    %134 = vmatprep.subr.mxu0 0.0
    %135 = vmatpush2.msra.mxu0 0.0
    %136 = vmatprep.subr.mxu0 0.0
    %137 = vmatpush2.msra.mxu0 0.0
    %138 = vmatprep.subr.mxu0 0.0
    %139 = vmatpush2.msra.mxu0 0.0
    %140 = vmatprep.subr.mxu0 0.0
    %141 = vmatpush2.msra.mxu0 0.0
    %142 = vmatprep.subr.mxu0 0.0
    %143 = vmatpush2.msra.mxu0 0.0
    %144 = vmatprep.subr.mxu0 0.0
    %145 = vmatpush2.msra.mxu0 0.0
    %146 = vmatprep.subr.mxu0 0.0
    %147 = vmatpush2.msra.mxu0 0.0
    %148 = vmatprep.mubr.f32.mxu0 0.0
    %149 = vmatmul.mubr.f32.gmra.mxu0 %v82
    %v150 = vpop.f32.mrf.mxu0
    %v151 = vadd.f32 0.0, %v150
    %v152 = vpop.f32.mrf.mxu0
    %v153 = vadd.f32 0.0, %v152
    %154 = vdwg.mxu0
    %v155 = vadd.f32 %v78, %v151
    %v156 = vadd.f32 %v79, %v153
    %v157 = vxor.u32 %v155, 2147483648
    %v158 = vxor.u32 %v156, 2147483648
    %v159 = vmul.f32 %v157, 1.442695
    %v160 = vpow.pop %v159
    %v161 = vmul.f32 %v158, 1.442695
    %v162 = vpow.pop %v161
    %v163 = vadd.f32 %v160, 1.0
    %v164 = vadd.f32 %v162, 1.0
    %v165 = vrcp.pop %v163
    %v166 = vmul.f32 1.0, %v165
    %v167 = vrcp.pop %v164
    %v168 = vmul.f32 1.0, %v167
    %v169 = vtanh.pop %v156
    %v170 = vmul.f32 %v166, 0.0
    %v171 = vmul.f32 %v166, %v169
    %173 = vrot.lane.b32.xlu0 %v171, 64
    %v174 = vpop.permute.xlu0 %173
    %v176 = vadd.f32 %v170, %v174
    %v177 = vtanh.pop %v176
    %v178 = vmul.f32 %v168, %v177
    %180 = vrot.lane.b32.xlu0 %v176, 64
    %v181 = vpop.permute.xlu0 %180
    %v183 = vsel %vm77, %v181, 0.0
    %185 = vrot.lane.b32.xlu0 %v178, 64
    %v186 = vpop.permute.xlu0 %185
    %v188 = vsel %vm77, %v186, 0.0
    %s189 = scalar_lea.vmem [#allocation2], 16
    %v190 = vld [vmem:[%s189] sm:$0xff]
    %v191 = vld [vmem:[%s189 + $0x8] sm:$0xff]
    %v193 = vsel %vm80, %v188, 0
    %195 = vmatprep.subr.mxu0 0.0
    %196 = vmatpush1.msra.mxu0 0.0
    %197 = vmatprep.subr.mxu0 0.0
    %198 = vmatpush1.msra.mxu0 0.0
    %199 = vmatprep.subr.mxu0 0.0
    %200 = vmatpush1.msra.mxu0 0.0
    %201 = vmatprep.subr.mxu0 0.0
    %202 = vmatpush1.msra.mxu0 0.0
    %203 = vmatprep.subr.mxu0 0.0
    %204 = vmatpush1.msra.mxu0 0.0
    %205 = vmatprep.subr.mxu0 0.0
    %206 = vmatpush1.msra.mxu0 0.0
    %207 = vmatprep.subr.mxu0 0.0
    %208 = vmatpush1.msra.mxu0 0.0
    %209 = vmatprep.subr.mxu0 0.0
    %210 = vmatpush1.msra.mxu0 0.0
    %211 = vmatprep.subr.mxu0 %v74
    %212 = vmatpush1.msra.mxu0 %v73
    %213 = vmatprep.subr.mxu0 %v72
    %214 = vmatpush1.msra.mxu0 %v71
    %215 = vmatprep.subr.mxu0 %v70
    %216 = vmatpush1.msra.mxu0 %v69
    %217 = vmatprep.subr.mxu0 %v68
    %218 = vmatpush1.msra.mxu0 %v67
    %219 = vmatprep.subr.mxu0 %v66
    %220 = vmatpush1.msra.mxu0 %v65
    %221 = vmatprep.subr.mxu0 %v64
    %222 = vmatpush1.msra.mxu0 %v63
    %223 = vmatprep.subr.mxu0 %v62
    %224 = vmatpush1.msra.mxu0 %v61
    %225 = vmatprep.subr.mxu0 %v60
    %226 = vmatpush1.msra.mxu0 %v59
    %227 = vmatprep.subr.mxu0 0.0
    %228 = vmatpush2.msra.mxu0 0.0
    %229 = vmatprep.subr.mxu0 0.0
    %230 = vmatpush2.msra.mxu0 0.0
    %231 = vmatprep.subr.mxu0 0.0
    %232 = vmatpush2.msra.mxu0 0.0
    %233 = vmatprep.subr.mxu0 0.0
    %234 = vmatpush2.msra.mxu0 0.0
    %235 = vmatprep.subr.mxu0 0.0
    %236 = vmatpush2.msra.mxu0 0.0
    %237 = vmatprep.subr.mxu0 0.0
    %238 = vmatpush2.msra.mxu0 0.0
    %239 = vmatprep.subr.mxu0 0.0
    %240 = vmatpush2.msra.mxu0 0.0
    %241 = vmatprep.subr.mxu0 0.0
    %242 = vmatpush2.msra.mxu0 0.0
    %243 = vmatprep.subr.mxu0 0.0
    %244 = vmatpush2.msra.mxu0 0.0
    %245 = vmatprep.subr.mxu0 0.0
    %246 = vmatpush2.msra.mxu0 0.0
    %247 = vmatprep.subr.mxu0 0.0
    %248 = vmatpush2.msra.mxu0 0.0
    %249 = vmatprep.subr.mxu0 0.0
    %250 = vmatpush2.msra.mxu0 0.0
    %251 = vmatprep.subr.mxu0 0.0
    %252 = vmatpush2.msra.mxu0 0.0
    %253 = vmatprep.subr.mxu0 0.0
    %254 = vmatpush2.msra.mxu0 0.0
    %255 = vmatprep.subr.mxu0 0.0
    %256 = vmatpush2.msra.mxu0 0.0
    %257 = vmatprep.subr.mxu0 0.0
    %258 = vmatpush2.msra.mxu0 0.0
    %259 = vmatprep.mubr.f32.mxu0 0.0
    %260 = vmatmul.mubr.f32.gmra.mxu0 %v193
    %v261 = vpop.f32.mrf.mxu0
    %v262 = vadd.f32 0.0, %v261
    %v263 = vpop.f32.mrf.mxu0
    %v264 = vadd.f32 0.0, %v263
    %265 = vdwg.mxu0
    %v266 = vadd.f32 %v190, %v262
    %v267 = vadd.f32 %v191, %v264
    %v268 = vxor.u32 %v266, 2147483648
    %v269 = vxor.u32 %v267, 2147483648
    %v270 = vmul.f32 %v268, 1.442695
    %v271 = vpow.pop %v270
    %v272 = vmul.f32 %v269, 1.442695
    %v273 = vpow.pop %v272
    %v274 = vadd.f32 %v271, 1.0
    %v275 = vadd.f32 %v273, 1.0
    %v276 = vrcp.pop %v274
    %v277 = vmul.f32 1.0, %v276
    %v278 = vrcp.pop %v275
    %v279 = vmul.f32 1.0, %v278
    %v280 = vtanh.pop %v267
    %282 = vrot.lane.b32.xlu0 %v183, 64
    %v283 = vpop.permute.xlu0 %282
    %v285 = vmul.f32 %v277, %v283
    %v286 = vmul.f32 %v277, %v280
    %288 = vrot.lane.b32.xlu0 %v286, 64
    %v289 = vpop.permute.xlu0 %288
    %v291 = vadd.f32 %v285, %v289
    %v292 = vtanh.pop %v291
    %v293 = vmul.f32 %v279, %v292
    %s294 = scalar_lea.vmem [#allocation2], 32
    %v295 = vld [vmem:[%s294] sm:$0xff]
    %v296 = vld [vmem:[%s294 + $0x8] sm:$0xff]
    %298 = vrot.lane.b32.xlu0 %v293, 64
    %v299 = vpop.permute.xlu0 %298
    %v300 = vsel %vm80, %v299, 0
    %302 = vmatprep.subr.mxu0 0.0
    %303 = vmatpush1.msra.mxu0 0.0
    %304 = vmatprep.subr.mxu0 0.0
    %305 = vmatpush1.msra.mxu0 0.0
    %306 = vmatprep.subr.mxu0 0.0
    %307 = vmatpush1.msra.mxu0 0.0
    %308 = vmatprep.subr.mxu0 0.0
    %309 = vmatpush1.msra.mxu0 0.0
    %310 = vmatprep.subr.mxu0 0.0
    %311 = vmatpush1.msra.mxu0 0.0
    %312 = vmatprep.subr.mxu0 0.0
    %313 = vmatpush1.msra.mxu0 0.0
    %314 = vmatprep.subr.mxu0 0.0
    %315 = vmatpush1.msra.mxu0 0.0
    %316 = vmatprep.subr.mxu0 0.0
    %317 = vmatpush1.msra.mxu0 0.0
    %318 = vmatprep.subr.mxu0 %v74
    %319 = vmatpush1.msra.mxu0 %v73
    %320 = vmatprep.subr.mxu0 %v72
    %321 = vmatpush1.msra.mxu0 %v71
    %322 = vmatprep.subr.mxu0 %v70
    %323 = vmatpush1.msra.mxu0 %v69
    %324 = vmatprep.subr.mxu0 %v68
    %325 = vmatpush1.msra.mxu0 %v67
    %326 = vmatprep.subr.mxu0 %v66
    %327 = vmatpush1.msra.mxu0 %v65
    %328 = vmatprep.subr.mxu0 %v64
    %329 = vmatpush1.msra.mxu0 %v63
    %330 = vmatprep.subr.mxu0 %v62
    %331 = vmatpush1.msra.mxu0 %v61
    %332 = vmatprep.subr.mxu0 %v60
    %333 = vmatpush1.msra.mxu0 %v59
    %334 = vmatprep.subr.mxu0 0.0
    %335 = vmatpush2.msra.mxu0 0.0
    %336 = vmatprep.subr.mxu0 0.0
    %337 = vmatpush2.msra.mxu0 0.0
    %338 = vmatprep.subr.mxu0 0.0
    %339 = vmatpush2.msra.mxu0 0.0
    %340 = vmatprep.subr.mxu0 0.0
    %341 = vmatpush2.msra.mxu0 0.0
    %342 = vmatprep.subr.mxu0 0.0
    %343 = vmatpush2.msra.mxu0 0.0
    %344 = vmatprep.subr.mxu0 0.0
    %345 = vmatpush2.msra.mxu0 0.0
    %346 = vmatprep.subr.mxu0 0.0
    %347 = vmatpush2.msra.mxu0 0.0
    %348 = vmatprep.subr.mxu0 0.0
    %349 = vmatpush2.msra.mxu0 0.0
    %350 = vmatprep.subr.mxu0 0.0
    %351 = vmatpush2.msra.mxu0 0.0
    %352 = vmatprep.subr.mxu0 0.0
    %353 = vmatpush2.msra.mxu0 0.0
    %354 = vmatprep.subr.mxu0 0.0
    %355 = vmatpush2.msra.mxu0 0.0
    %356 = vmatprep.subr.mxu0 0.0
    %357 = vmatpush2.msra.mxu0 0.0
    %358 = vmatprep.subr.mxu0 0.0
    %359 = vmatpush2.msra.mxu0 0.0
    %360 = vmatprep.subr.mxu0 0.0
    %361 = vmatpush2.msra.mxu0 0.0
    %362 = vmatprep.subr.mxu0 0.0
    %363 = vmatpush2.msra.mxu0 0.0
    %364 = vmatprep.subr.mxu0 0.0
    %365 = vmatpush2.msra.mxu0 0.0
    %366 = vmatprep.mubr.f32.mxu0 0.0
    %367 = vmatmul.mubr.f32.gmra.mxu0 %v300
    %v368 = vpop.f32.mrf.mxu0
    %v369 = vadd.f32 0.0, %v368
    %v370 = vpop.f32.mrf.mxu0
    %v371 = vadd.f32 0.0, %v370
    %372 = vdwg.mxu0
    %v373 = vadd.f32 %v295, %v369
    %v374 = vadd.f32 %v296, %v371
    %v375 = vxor.u32 %v373, 2147483648
    %v376 = vxor.u32 %v374, 2147483648
    %v377 = vmul.f32 %v375, 1.442695
    %v378 = vpow.pop %v377
    %v379 = vmul.f32 %v376, 1.442695
    %v380 = vpow.pop %v379
    %v381 = vadd.f32 %v378, 1.0
    %v382 = vadd.f32 %v380, 1.0
    %v383 = vrcp.pop %v381
    %v384 = vmul.f32 1.0, %v383
    %v385 = vrcp.pop %v382
    %v386 = vmul.f32 1.0, %v385
    %v387 = vtanh.pop %v374
    %v388 = vmul.f32 %v384, %v291
    %v389 = vmul.f32 %v384, %v387
    %391 = vrot.lane.b32.xlu0 %v389, 64
    %v392 = vpop.permute.xlu0 %391
    %v394 = vadd.f32 %v388, %v392
    %v395 = vtanh.pop %v394
    %v396 = vmul.f32 %v386, %v395
    %s397 = scalar_lea.vmem [#allocation2], 48
    %v398 = vld [vmem:[%s397] sm:$0xff]
    %v399 = vld [vmem:[%s397 + $0x8] sm:$0xff]
    %401 = vrot.lane.b32.xlu0 %v396, 64
    %v402 = vpop.permute.xlu0 %401
    %v403 = vsel %vm80, %v402, 0
    %405 = vmatprep.subr.mxu0 0.0
    %406 = vmatpush1.msra.mxu0 0.0
    %407 = vmatprep.subr.mxu0 0.0
    %408 = vmatpush1.msra.mxu0 0.0
    %409 = vmatprep.subr.mxu0 0.0
    %410 = vmatpush1.msra.mxu0 0.0
    %411 = vmatprep.subr.mxu0 0.0
    %412 = vmatpush1.msra.mxu0 0.0
    %413 = vmatprep.subr.mxu0 0.0
    %414 = vmatpush1.msra.mxu0 0.0
    %415 = vmatprep.subr.mxu0 0.0
    %416 = vmatpush1.msra.mxu0 0.0
    %417 = vmatprep.subr.mxu0 0.0
    %418 = vmatpush1.msra.mxu0 0.0
    %419 = vmatprep.subr.mxu0 0.0
    %420 = vmatpush1.msra.mxu0 0.0
    %421 = vmatprep.subr.mxu0 %v74
    %422 = vmatpush1.msra.mxu0 %v73
    %423 = vmatprep.subr.mxu0 %v72
    %424 = vmatpush1.msra.mxu0 %v71
    %425 = vmatprep.subr.mxu0 %v70
    %426 = vmatpush1.msra.mxu0 %v69
    %427 = vmatprep.subr.mxu0 %v68
    %428 = vmatpush1.msra.mxu0 %v67
    %429 = vmatprep.subr.mxu0 %v66
    %430 = vmatpush1.msra.mxu0 %v65
    %431 = vmatprep.subr.mxu0 %v64
    %432 = vmatpush1.msra.mxu0 %v63
    %433 = vmatprep.subr.mxu0 %v62
    %434 = vmatpush1.msra.mxu0 %v61
    %435 = vmatprep.subr.mxu0 %v60
    %436 = vmatpush1.msra.mxu0 %v59
    %437 = vmatprep.subr.mxu0 0.0
    %438 = vmatpush2.msra.mxu0 0.0
    %439 = vmatprep.subr.mxu0 0.0
    %440 = vmatpush2.msra.mxu0 0.0
    %441 = vmatprep.subr.mxu0 0.0
    %442 = vmatpush2.msra.mxu0 0.0
    %443 = vmatprep.subr.mxu0 0.0
    %444 = vmatpush2.msra.mxu0 0.0
    %445 = vmatprep.subr.mxu0 0.0
    %446 = vmatpush2.msra.mxu0 0.0
    %447 = vmatprep.subr.mxu0 0.0
    %448 = vmatpush2.msra.mxu0 0.0
    %449 = vmatprep.subr.mxu0 0.0
    %450 = vmatpush2.msra.mxu0 0.0
    %451 = vmatprep.subr.mxu0 0.0
    %452 = vmatpush2.msra.mxu0 0.0
    %453 = vmatprep.subr.mxu0 0.0
    %454 = vmatpush2.msra.mxu0 0.0
    %455 = vmatprep.subr.mxu0 0.0
    %456 = vmatpush2.msra.mxu0 0.0
    %457 = vmatprep.subr.mxu0 0.0
    %458 = vmatpush2.msra.mxu0 0.0
    %459 = vmatprep.subr.mxu0 0.0
    %460 = vmatpush2.msra.mxu0 0.0
    %461 = vmatprep.subr.mxu0 0.0
    %462 = vmatpush2.msra.mxu0 0.0
    %463 = vmatprep.subr.mxu0 0.0
    %464 = vmatpush2.msra.mxu0 0.0
    %465 = vmatprep.subr.mxu0 0.0
    %466 = vmatpush2.msra.mxu0 0.0
    %467 = vmatprep.subr.mxu0 0.0
    %468 = vmatpush2.msra.mxu0 0.0
    %469 = vmatprep.mubr.f32.mxu0 0.0
    %470 = vmatmul.mubr.f32.gmra.mxu0 %v403
    %v471 = vpop.f32.mrf.mxu0
    %v472 = vadd.f32 0.0, %v471
    %v473 = vpop.f32.mrf.mxu0
    %v474 = vadd.f32 0.0, %v473
    %475 = vdwg.mxu0
    %v476 = vadd.f32 %v398, %v472
    %v477 = vadd.f32 %v399, %v474
    %v478 = vxor.u32 %v476, 2147483648
    %v479 = vxor.u32 %v477, 2147483648
    %v480 = vmul.f32 %v478, 1.442695
    %v481 = vpow.pop %v480
    %v482 = vmul.f32 %v479, 1.442695
    %v483 = vpow.pop %v482
    %v484 = vadd.f32 %v481, 1.0
    %v485 = vadd.f32 %v483, 1.0
    %v486 = vrcp.pop %v484
    %v487 = vmul.f32 1.0, %v486
    %v488 = vrcp.pop %v485
    %v489 = vmul.f32 1.0, %v488
    %v490 = vtanh.pop %v477
    %v491 = vmul.f32 %v487, %v394
    %v492 = vmul.f32 %v487, %v490
    %494 = vrot.lane.b32.xlu0 %v492, 64
    %v495 = vpop.permute.xlu0 %494
    %v497 = vadd.f32 %v491, %v495
    %v498 = vtanh.pop %v497
    %v499 = vmul.f32 %v489, %v498
    %s500 = scalar_lea.vmem [#allocation2], 64
    %v501 = vld [vmem:[%s500] sm:$0xff]
    %v502 = vld [vmem:[%s500 + $0x8] sm:$0xff]
    %504 = vrot.lane.b32.xlu0 %v499, 64
    %v505 = vpop.permute.xlu0 %504
    %v506 = vsel %vm80, %v505, 0
    %508 = vmatprep.subr.mxu0 0.0
    %509 = vmatpush1.msra.mxu0 0.0
    %510 = vmatprep.subr.mxu0 0.0
    %511 = vmatpush1.msra.mxu0 0.0
    %512 = vmatprep.subr.mxu0 0.0
    %513 = vmatpush1.msra.mxu0 0.0
    %514 = vmatprep.subr.mxu0 0.0
    %515 = vmatpush1.msra.mxu0 0.0
    %516 = vmatprep.subr.mxu0 0.0
    %517 = vmatpush1.msra.mxu0 0.0
    %518 = vmatprep.subr.mxu0 0.0
    %519 = vmatpush1.msra.mxu0 0.0
    %520 = vmatprep.subr.mxu0 0.0
    %521 = vmatpush1.msra.mxu0 0.0
    %522 = vmatprep.subr.mxu0 0.0
    %523 = vmatpush1.msra.mxu0 0.0
    %524 = vmatprep.subr.mxu0 %v74
    %525 = vmatpush1.msra.mxu0 %v73
    %526 = vmatprep.subr.mxu0 %v72
    %527 = vmatpush1.msra.mxu0 %v71
    %528 = vmatprep.subr.mxu0 %v70
    %529 = vmatpush1.msra.mxu0 %v69
    %530 = vmatprep.subr.mxu0 %v68
    %531 = vmatpush1.msra.mxu0 %v67
    %532 = vmatprep.subr.mxu0 %v66
    %533 = vmatpush1.msra.mxu0 %v65
    %534 = vmatprep.subr.mxu0 %v64
    %535 = vmatpush1.msra.mxu0 %v63
    %536 = vmatprep.subr.mxu0 %v62
    %537 = vmatpush1.msra.mxu0 %v61
    %538 = vmatprep.subr.mxu0 %v60
    %539 = vmatpush1.msra.mxu0 %v59
    %540 = vmatprep.subr.mxu0 0.0
    %541 = vmatpush2.msra.mxu0 0.0
    %542 = vmatprep.subr.mxu0 0.0
    %543 = vmatpush2.msra.mxu0 0.0
    %544 = vmatprep.subr.mxu0 0.0
    %545 = vmatpush2.msra.mxu0 0.0
    %546 = vmatprep.subr.mxu0 0.0
    %547 = vmatpush2.msra.mxu0 0.0
    %548 = vmatprep.subr.mxu0 0.0
    %549 = vmatpush2.msra.mxu0 0.0
    %550 = vmatprep.subr.mxu0 0.0
    %551 = vmatpush2.msra.mxu0 0.0
    %552 = vmatprep.subr.mxu0 0.0
    %553 = vmatpush2.msra.mxu0 0.0
    %554 = vmatprep.subr.mxu0 0.0
    %555 = vmatpush2.msra.mxu0 0.0
    %556 = vmatprep.subr.mxu0 0.0
    %557 = vmatpush2.msra.mxu0 0.0
    %558 = vmatprep.subr.mxu0 0.0
    %559 = vmatpush2.msra.mxu0 0.0
    %560 = vmatprep.subr.mxu0 0.0
    %561 = vmatpush2.msra.mxu0 0.0
    %562 = vmatprep.subr.mxu0 0.0
    %563 = vmatpush2.msra.mxu0 0.0
    %564 = vmatprep.subr.mxu0 0.0
    %565 = vmatpush2.msra.mxu0 0.0
    %566 = vmatprep.subr.mxu0 0.0
    %567 = vmatpush2.msra.mxu0 0.0
    %568 = vmatprep.subr.mxu0 0.0
    %569 = vmatpush2.msra.mxu0 0.0
    %570 = vmatprep.subr.mxu0 0.0
    %571 = vmatpush2.msra.mxu0 0.0
    %572 = vmatprep.mubr.f32.mxu0 0.0
    %573 = vmatmul.mubr.f32.gmra.mxu0 %v506
    %v574 = vpop.f32.mrf.mxu0
    %v575 = vadd.f32 0.0, %v574
    %v576 = vpop.f32.mrf.mxu0
    %v577 = vadd.f32 0.0, %v576
    %578 = vdwg.mxu0
    %v579 = vadd.f32 %v501, %v575
    %v580 = vadd.f32 %v502, %v577
    %v581 = vxor.u32 %v579, 2147483648
    %v582 = vxor.u32 %v580, 2147483648
    %v583 = vmul.f32 %v581, 1.442695
    %v584 = vpow.pop %v583
    %v585 = vmul.f32 %v582, 1.442695
    %v586 = vpow.pop %v585
    %v587 = vadd.f32 %v584, 1.0
    %v588 = vadd.f32 %v586, 1.0
    %v589 = vrcp.pop %v587
    %v590 = vmul.f32 1.0, %v589
    %v591 = vrcp.pop %v588
    %v592 = vmul.f32 1.0, %v591
    %v593 = vtanh.pop %v580
    %v594 = vmul.f32 %v590, %v497
    %v595 = vmul.f32 %v590, %v593
    %597 = vrot.lane.b32.xlu0 %v595, 64
    %v598 = vpop.permute.xlu0 %597
    %v600 = vadd.f32 %v594, %v598
    %v601 = vtanh.pop %v600
    %v602 = vmul.f32 %v592, %v601
    %s603 = scalar_lea.vmem [#allocation2], 80
    %v604 = vld [vmem:[%s603] sm:$0xff]
    %v605 = vld [vmem:[%s603 + $0x8] sm:$0xff]
    %607 = vrot.lane.b32.xlu0 %v602, 64
    %v608 = vpop.permute.xlu0 %607
    %v609 = vsel %vm80, %v608, 0
    %611 = vmatprep.subr.mxu0 0.0
    %612 = vmatpush1.msra.mxu0 0.0
    %613 = vmatprep.subr.mxu0 0.0
    %614 = vmatpush1.msra.mxu0 0.0
    %615 = vmatprep.subr.mxu0 0.0
    %616 = vmatpush1.msra.mxu0 0.0
    %617 = vmatprep.subr.mxu0 0.0
    %618 = vmatpush1.msra.mxu0 0.0
    %619 = vmatprep.subr.mxu0 0.0
    %620 = vmatpush1.msra.mxu0 0.0
    %621 = vmatprep.subr.mxu0 0.0
    %622 = vmatpush1.msra.mxu0 0.0
    %623 = vmatprep.subr.mxu0 0.0
    %624 = vmatpush1.msra.mxu0 0.0
    %625 = vmatprep.subr.mxu0 0.0
    %626 = vmatpush1.msra.mxu0 0.0
    %627 = vmatprep.subr.mxu0 %v74
    %628 = vmatpush1.msra.mxu0 %v73
    %629 = vmatprep.subr.mxu0 %v72
    %630 = vmatpush1.msra.mxu0 %v71
    %631 = vmatprep.subr.mxu0 %v70
    %632 = vmatpush1.msra.mxu0 %v69
    %633 = vmatprep.subr.mxu0 %v68
    %634 = vmatpush1.msra.mxu0 %v67
    %635 = vmatprep.subr.mxu0 %v66
    %636 = vmatpush1.msra.mxu0 %v65
    %637 = vmatprep.subr.mxu0 %v64
    %638 = vmatpush1.msra.mxu0 %v63
    %639 = vmatprep.subr.mxu0 %v62
    %640 = vmatpush1.msra.mxu0 %v61
    %641 = vmatprep.subr.mxu0 %v60
    %642 = vmatpush1.msra.mxu0 %v59
    %643 = vmatprep.subr.mxu0 0.0
    %644 = vmatpush2.msra.mxu0 0.0
    %645 = vmatprep.subr.mxu0 0.0
    %646 = vmatpush2.msra.mxu0 0.0
    %647 = vmatprep.subr.mxu0 0.0
    %648 = vmatpush2.msra.mxu0 0.0
    %649 = vmatprep.subr.mxu0 0.0
    %650 = vmatpush2.msra.mxu0 0.0
    %651 = vmatprep.subr.mxu0 0.0
    %652 = vmatpush2.msra.mxu0 0.0
    %653 = vmatprep.subr.mxu0 0.0
    %654 = vmatpush2.msra.mxu0 0.0
    %655 = vmatprep.subr.mxu0 0.0
    %656 = vmatpush2.msra.mxu0 0.0
    %657 = vmatprep.subr.mxu0 0.0
    %658 = vmatpush2.msra.mxu0 0.0
    %659 = vmatprep.subr.mxu0 0.0
    %660 = vmatpush2.msra.mxu0 0.0
    %661 = vmatprep.subr.mxu0 0.0
    %662 = vmatpush2.msra.mxu0 0.0
    %663 = vmatprep.subr.mxu0 0.0
    %664 = vmatpush2.msra.mxu0 0.0
    %665 = vmatprep.subr.mxu0 0.0
    %666 = vmatpush2.msra.mxu0 0.0
    %667 = vmatprep.subr.mxu0 0.0
    %668 = vmatpush2.msra.mxu0 0.0
    %669 = vmatprep.subr.mxu0 0.0
    %670 = vmatpush2.msra.mxu0 0.0
    %671 = vmatprep.subr.mxu0 0.0
    %672 = vmatpush2.msra.mxu0 0.0
    %673 = vmatprep.subr.mxu0 0.0
    %674 = vmatpush2.msra.mxu0 0.0
    %675 = vmatprep.mubr.f32.mxu0 0.0
    %676 = vmatmul.mubr.f32.gmra.mxu0 %v609
    %v677 = vpop.f32.mrf.mxu0
    %v678 = vadd.f32 0.0, %v677
    %v679 = vpop.f32.mrf.mxu0
    %v680 = vadd.f32 0.0, %v679
    %681 = vdwg.mxu0
    %v682 = vadd.f32 %v604, %v678
    %v683 = vadd.f32 %v605, %v680
    %v684 = vxor.u32 %v682, 2147483648
    %v685 = vxor.u32 %v683, 2147483648
    %v686 = vmul.f32 %v684, 1.442695
    %v687 = vpow.pop %v686
    %v688 = vmul.f32 %v685, 1.442695
    %v689 = vpow.pop %v688
    %v690 = vadd.f32 %v687, 1.0
    %v691 = vadd.f32 %v689, 1.0
    %v692 = vrcp.pop %v690
    %v693 = vmul.f32 1.0, %v692
    %v694 = vrcp.pop %v691
    %v695 = vmul.f32 1.0, %v694
    %v696 = vtanh.pop %v683
    %v697 = vmul.f32 %v693, %v600
    %v698 = vmul.f32 %v693, %v696
    %700 = vrot.lane.b32.xlu0 %v698, 64
    %v701 = vpop.permute.xlu0 %700
    %v703 = vadd.f32 %v697, %v701
    %v704 = vtanh.pop %v703
    %v705 = vmul.f32 %v695, %v704
    %s706 = scalar_lea.vmem [#allocation2], 96
    %v707 = vld [vmem:[%s706] sm:$0xff]
    %v708 = vld [vmem:[%s706 + $0x8] sm:$0xff]
    %710 = vrot.lane.b32.xlu0 %v705, 64
    %v711 = vpop.permute.xlu0 %710
    %v712 = vsel %vm80, %v711, 0
    %714 = vmatprep.subr.mxu0 0.0
    %715 = vmatpush1.msra.mxu0 0.0
    %716 = vmatprep.subr.mxu0 0.0
    %717 = vmatpush1.msra.mxu0 0.0
    %718 = vmatprep.subr.mxu0 0.0
    %719 = vmatpush1.msra.mxu0 0.0
    %720 = vmatprep.subr.mxu0 0.0
    %721 = vmatpush1.msra.mxu0 0.0
    %722 = vmatprep.subr.mxu0 0.0
    %723 = vmatpush1.msra.mxu0 0.0
    %724 = vmatprep.subr.mxu0 0.0
    %725 = vmatpush1.msra.mxu0 0.0
    %726 = vmatprep.subr.mxu0 0.0
    %727 = vmatpush1.msra.mxu0 0.0
    %728 = vmatprep.subr.mxu0 0.0
    %729 = vmatpush1.msra.mxu0 0.0
    %730 = vmatprep.subr.mxu0 %v74
    %731 = vmatpush1.msra.mxu0 %v73
    %732 = vmatprep.subr.mxu0 %v72
    %733 = vmatpush1.msra.mxu0 %v71
    %734 = vmatprep.subr.mxu0 %v70
    %735 = vmatpush1.msra.mxu0 %v69
    %736 = vmatprep.subr.mxu0 %v68
    %737 = vmatpush1.msra.mxu0 %v67
    %738 = vmatprep.subr.mxu0 %v66
    %739 = vmatpush1.msra.mxu0 %v65
    %740 = vmatprep.subr.mxu0 %v64
    %741 = vmatpush1.msra.mxu0 %v63
    %742 = vmatprep.subr.mxu0 %v62
    %743 = vmatpush1.msra.mxu0 %v61
    %744 = vmatprep.subr.mxu0 %v60
    %745 = vmatpush1.msra.mxu0 %v59
    %746 = vmatprep.subr.mxu0 0.0
    %747 = vmatpush2.msra.mxu0 0.0
    %748 = vmatprep.subr.mxu0 0.0
    %749 = vmatpush2.msra.mxu0 0.0
    %750 = vmatprep.subr.mxu0 0.0
    %751 = vmatpush2.msra.mxu0 0.0
    %752 = vmatprep.subr.mxu0 0.0
    %753 = vmatpush2.msra.mxu0 0.0
    %754 = vmatprep.subr.mxu0 0.0
    %755 = vmatpush2.msra.mxu0 0.0
    %756 = vmatprep.subr.mxu0 0.0
    %757 = vmatpush2.msra.mxu0 0.0
    %758 = vmatprep.subr.mxu0 0.0
    %759 = vmatpush2.msra.mxu0 0.0
    %760 = vmatprep.subr.mxu0 0.0
    %761 = vmatpush2.msra.mxu0 0.0
    %762 = vmatprep.subr.mxu0 0.0
    %763 = vmatpush2.msra.mxu0 0.0
    %764 = vmatprep.subr.mxu0 0.0
    %765 = vmatpush2.msra.mxu0 0.0
    %766 = vmatprep.subr.mxu0 0.0
    %767 = vmatpush2.msra.mxu0 0.0
    %768 = vmatprep.subr.mxu0 0.0
    %769 = vmatpush2.msra.mxu0 0.0
    %770 = vmatprep.subr.mxu0 0.0
    %771 = vmatpush2.msra.mxu0 0.0
    %772 = vmatprep.subr.mxu0 0.0
    %773 = vmatpush2.msra.mxu0 0.0
    %774 = vmatprep.subr.mxu0 0.0
    %775 = vmatpush2.msra.mxu0 0.0
    %776 = vmatprep.subr.mxu0 0.0
    %777 = vmatpush2.msra.mxu0 0.0
    %778 = vmatprep.mubr.f32.mxu0 0.0
    %779 = vmatmul.mubr.f32.gmra.mxu0 %v712
    %v780 = vpop.f32.mrf.mxu0
    %v781 = vadd.f32 0.0, %v780
    %v782 = vpop.f32.mrf.mxu0
    %v783 = vadd.f32 0.0, %v782
    %784 = vdwg.mxu0
    %v785 = vadd.f32 %v707, %v781
    %v786 = vadd.f32 %v708, %v783
    %v787 = vxor.u32 %v785, 2147483648
    %v788 = vxor.u32 %v786, 2147483648
    %v789 = vmul.f32 %v787, 1.442695
    %v790 = vpow.pop %v789
    %v791 = vmul.f32 %v788, 1.442695
    %v792 = vpow.pop %v791
    %v793 = vadd.f32 %v790, 1.0
    %v794 = vadd.f32 %v792, 1.0
    %v795 = vrcp.pop %v793
    %v796 = vmul.f32 1.0, %v795
    %v797 = vrcp.pop %v794
    %v798 = vmul.f32 1.0, %v797
    %v799 = vtanh.pop %v786
    %v800 = vmul.f32 %v796, %v703
    %v801 = vmul.f32 %v796, %v799
    %803 = vrot.lane.b32.xlu0 %v801, 64
    %v804 = vpop.permute.xlu0 %803
    %v806 = vadd.f32 %v800, %v804
    %v807 = vtanh.pop %v806
    %v808 = vmul.f32 %v798, %v807
    %s809 = scalar_lea.vmem [#allocation2], 112
    %v810 = vld [vmem:[%s809] sm:$0xff]
    %v811 = vld [vmem:[%s809 + $0x8] sm:$0xff]
    %813 = vrot.lane.b32.xlu0 %v808, 64
    %v814 = vpop.permute.xlu0 %813
    %v815 = vsel %vm80, %v814, 0
    %817 = vmatprep.subr.mxu0 0.0
    %818 = vmatpush1.msra.mxu0 0.0
    %819 = vmatprep.subr.mxu0 0.0
    %820 = vmatpush1.msra.mxu0 0.0
    %821 = vmatprep.subr.mxu0 0.0
    %822 = vmatpush1.msra.mxu0 0.0
    %823 = vmatprep.subr.mxu0 0.0
    %824 = vmatpush1.msra.mxu0 0.0
    %825 = vmatprep.subr.mxu0 0.0
    %826 = vmatpush1.msra.mxu0 0.0
    %827 = vmatprep.subr.mxu0 0.0
    %828 = vmatpush1.msra.mxu0 0.0
    %829 = vmatprep.subr.mxu0 0.0
    %830 = vmatpush1.msra.mxu0 0.0
    %831 = vmatprep.subr.mxu0 0.0
    %832 = vmatpush1.msra.mxu0 0.0
    %833 = vmatprep.subr.mxu0 %v74
    %834 = vmatpush1.msra.mxu0 %v73
    %835 = vmatprep.subr.mxu0 %v72
    %836 = vmatpush1.msra.mxu0 %v71
    %837 = vmatprep.subr.mxu0 %v70
    %838 = vmatpush1.msra.mxu0 %v69
    %839 = vmatprep.subr.mxu0 %v68
    %840 = vmatpush1.msra.mxu0 %v67
    %841 = vmatprep.subr.mxu0 %v66
    %842 = vmatpush1.msra.mxu0 %v65
    %843 = vmatprep.subr.mxu0 %v64
    %844 = vmatpush1.msra.mxu0 %v63
    %845 = vmatprep.subr.mxu0 %v62
    %846 = vmatpush1.msra.mxu0 %v61
    %847 = vmatprep.subr.mxu0 %v60
    %848 = vmatpush1.msra.mxu0 %v59
    %849 = vmatprep.subr.mxu0 0.0
    %850 = vmatpush2.msra.mxu0 0.0
    %851 = vmatprep.subr.mxu0 0.0
    %852 = vmatpush2.msra.mxu0 0.0
    %853 = vmatprep.subr.mxu0 0.0
    %854 = vmatpush2.msra.mxu0 0.0
    %855 = vmatprep.subr.mxu0 0.0
    %856 = vmatpush2.msra.mxu0 0.0
    %857 = vmatprep.subr.mxu0 0.0
    %858 = vmatpush2.msra.mxu0 0.0
    %859 = vmatprep.subr.mxu0 0.0
    %860 = vmatpush2.msra.mxu0 0.0
    %861 = vmatprep.subr.mxu0 0.0
    %862 = vmatpush2.msra.mxu0 0.0
    %863 = vmatprep.subr.mxu0 0.0
    %864 = vmatpush2.msra.mxu0 0.0
    %865 = vmatprep.subr.mxu0 0.0
    %866 = vmatpush2.msra.mxu0 0.0
    %867 = vmatprep.subr.mxu0 0.0
    %868 = vmatpush2.msra.mxu0 0.0
    %869 = vmatprep.subr.mxu0 0.0
    %870 = vmatpush2.msra.mxu0 0.0
    %871 = vmatprep.subr.mxu0 0.0
    %872 = vmatpush2.msra.mxu0 0.0
    %873 = vmatprep.subr.mxu0 0.0
    %874 = vmatpush2.msra.mxu0 0.0
    %875 = vmatprep.subr.mxu0 0.0
    %876 = vmatpush2.msra.mxu0 0.0
    %877 = vmatprep.subr.mxu0 0.0
    %878 = vmatpush2.msra.mxu0 0.0
    %879 = vmatprep.subr.mxu0 0.0
    %880 = vmatpush2.msra.mxu0 0.0
    %881 = vmatprep.mubr.f32.mxu0 0.0
    %882 = vmatmul.mubr.f32.gmra.mxu0 %v815
    %v883 = vpop.f32.mrf.mxu0
    %v884 = vadd.f32 0.0, %v883
    %v885 = vpop.f32.mrf.mxu0
    %v886 = vadd.f32 0.0, %v885
    %887 = vdwg.mxu0
    %v888 = vadd.f32 %v810, %v884
    %v889 = vadd.f32 %v811, %v886
    %v890 = vxor.u32 %v888, 2147483648
    %v891 = vxor.u32 %v889, 2147483648
    %v892 = vmul.f32 %v890, 1.442695
    %v893 = vpow.pop %v892
    %v894 = vmul.f32 %v891, 1.442695
    %v895 = vpow.pop %v894
    %v896 = vadd.f32 %v893, 1.0
    %v897 = vadd.f32 %v895, 1.0
    %v898 = vrcp.pop %v896
    %v899 = vmul.f32 1.0, %v898
    %v900 = vrcp.pop %v897
    %v901 = vmul.f32 1.0, %v900
    %v902 = vtanh.pop %v889
    %v903 = vmul.f32 %v899, %v806
    %v904 = vmul.f32 %v899, %v902
    %906 = vrot.lane.b32.xlu0 %v904, 64
    %v907 = vpop.permute.xlu0 %906
    %v909 = vadd.f32 %v903, %v907
    %v910 = vtanh.pop %v909
    %v911 = vmul.f32 %v901, %v910
    %s912 = scalar_lea.vmem [#allocation2], 128
    %v913 = vld [vmem:[%s912] sm:$0xff]
    %v914 = vld [vmem:[%s912 + $0x8] sm:$0xff]
    %916 = vrot.lane.b32.xlu0 %v911, 64
    %v917 = vpop.permute.xlu0 %916
    %v918 = vsel %vm80, %v917, 0
    %920 = vmatprep.subr.mxu0 0.0
    %921 = vmatpush1.msra.mxu0 0.0
    %922 = vmatprep.subr.mxu0 0.0
    %923 = vmatpush1.msra.mxu0 0.0
    %924 = vmatprep.subr.mxu0 0.0
    %925 = vmatpush1.msra.mxu0 0.0
    %926 = vmatprep.subr.mxu0 0.0
    %927 = vmatpush1.msra.mxu0 0.0
    %928 = vmatprep.subr.mxu0 0.0
    %929 = vmatpush1.msra.mxu0 0.0
    %930 = vmatprep.subr.mxu0 0.0
    %931 = vmatpush1.msra.mxu0 0.0
    %932 = vmatprep.subr.mxu0 0.0
    %933 = vmatpush1.msra.mxu0 0.0
    %934 = vmatprep.subr.mxu0 0.0
    %935 = vmatpush1.msra.mxu0 0.0
    %936 = vmatprep.subr.mxu0 %v74
    %937 = vmatpush1.msra.mxu0 %v73
    %938 = vmatprep.subr.mxu0 %v72
    %939 = vmatpush1.msra.mxu0 %v71
    %940 = vmatprep.subr.mxu0 %v70
    %941 = vmatpush1.msra.mxu0 %v69
    %942 = vmatprep.subr.mxu0 %v68
    %943 = vmatpush1.msra.mxu0 %v67
    %944 = vmatprep.subr.mxu0 %v66
    %945 = vmatpush1.msra.mxu0 %v65
    %946 = vmatprep.subr.mxu0 %v64
    %947 = vmatpush1.msra.mxu0 %v63
    %948 = vmatprep.subr.mxu0 %v62
    %949 = vmatpush1.msra.mxu0 %v61
    %950 = vmatprep.subr.mxu0 %v60
    %951 = vmatpush1.msra.mxu0 %v59
    %952 = vmatprep.subr.mxu0 0.0
    %953 = vmatpush2.msra.mxu0 0.0
    %954 = vmatprep.subr.mxu0 0.0
    %955 = vmatpush2.msra.mxu0 0.0
    %956 = vmatprep.subr.mxu0 0.0
    %957 = vmatpush2.msra.mxu0 0.0
    %958 = vmatprep.subr.mxu0 0.0
    %959 = vmatpush2.msra.mxu0 0.0
    %960 = vmatprep.subr.mxu0 0.0
    %961 = vmatpush2.msra.mxu0 0.0
    %962 = vmatprep.subr.mxu0 0.0
    %963 = vmatpush2.msra.mxu0 0.0
    %964 = vmatprep.subr.mxu0 0.0
    %965 = vmatpush2.msra.mxu0 0.0
    %966 = vmatprep.subr.mxu0 0.0
    %967 = vmatpush2.msra.mxu0 0.0
    %968 = vmatprep.subr.mxu0 0.0
    %969 = vmatpush2.msra.mxu0 0.0
    %970 = vmatprep.subr.mxu0 0.0
    %971 = vmatpush2.msra.mxu0 0.0
    %972 = vmatprep.subr.mxu0 0.0
    %973 = vmatpush2.msra.mxu0 0.0
    %974 = vmatprep.subr.mxu0 0.0
    %975 = vmatpush2.msra.mxu0 0.0
    %976 = vmatprep.subr.mxu0 0.0
    %977 = vmatpush2.msra.mxu0 0.0
    %978 = vmatprep.subr.mxu0 0.0
    %979 = vmatpush2.msra.mxu0 0.0
    %980 = vmatprep.subr.mxu0 0.0
    %981 = vmatpush2.msra.mxu0 0.0
    %982 = vmatprep.subr.mxu0 0.0
    %983 = vmatpush2.msra.mxu0 0.0
    %984 = vmatprep.mubr.f32.mxu0 0.0
    %985 = vmatmul.mubr.f32.gmra.mxu0 %v918
    %v986 = vpop.f32.mrf.mxu0
    %v987 = vadd.f32 0.0, %v986
    %v988 = vpop.f32.mrf.mxu0
    %v989 = vadd.f32 0.0, %v988
    %990 = vdwg.mxu0
    %v991 = vadd.f32 %v913, %v987
    %v992 = vadd.f32 %v914, %v989
    %v993 = vxor.u32 %v991, 2147483648
    %v994 = vxor.u32 %v992, 2147483648
    %v995 = vmul.f32 %v993, 1.442695
    %v996 = vpow.pop %v995
    %v997 = vmul.f32 %v994, 1.442695
    %v998 = vpow.pop %v997
    %v999 = vadd.f32 %v996, 1.0
    %v1000 = vadd.f32 %v998, 1.0
    %v1001 = vrcp.pop %v999
    %v1002 = vmul.f32 1.0, %v1001
    %v1003 = vrcp.pop %v1000
    %v1004 = vmul.f32 1.0, %v1003
    %v1005 = vtanh.pop %v992
    %v1006 = vmul.f32 %v1002, %v909
    %v1007 = vmul.f32 %v1002, %v1005
    %1009 = vrot.lane.b32.xlu0 %v1007, 64
    %v1010 = vpop.permute.xlu0 %1009
    %v1012 = vadd.f32 %v1006, %v1010
    %v1013 = vtanh.pop %v1012
    %v1014 = vmul.f32 %v1004, %v1013
    %v1015 = vld [vmem:[#allocation7] sm:$0xff]
    %v1016 = vld [vmem:[#allocation7 + $0x8] sm:$0xff]
    %v1017 = vld [vmem:[#allocation7 + $0x10] sm:$0xff]
    %v1018 = vld [vmem:[#allocation7 + $0x18] sm:$0xff]
    %v1019 = vld [vmem:[%s3] sm:$0x1]
    %v1021 = vlaneseq
    %v1022 = vshrl.u32 %v1021, 7
    %v1023 = vsub.s32 0, %v1022
    %v1024 = vrot.slane %v1019, %v1023
    %1027 = vrot.lane.b32.xlu0 %v1014, 32
    %v1028 = vpop.permute.xlu0 %1027
    %vm1029 = vcmask 261120
    %v1030 = vsel %vm1029, %v1028, 0
    %1032 = vmatprep.subr.mxu0 0.0
    %1033 = vmatpush1.msra.mxu0 0.0
    %1034 = vmatprep.subr.mxu0 0.0
    %1035 = vmatpush1.msra.mxu0 0.0
    %1036 = vmatprep.subr.mxu0 0.0
    %1037 = vmatpush1.msra.mxu0 0.0
    %1038 = vmatprep.subr.mxu0 0.0
    %1039 = vmatpush1.msra.mxu0 0.0
    %1040 = vmatprep.subr.mxu0 0.0
    %1041 = vmatpush1.msra.mxu0 0.0
    %1042 = vmatprep.subr.mxu0 0.0
    %1043 = vmatpush1.msra.mxu0 0.0
    %1044 = vmatprep.subr.mxu0 0.0
    %1045 = vmatpush1.msra.mxu0 0.0
    %1046 = vmatprep.subr.mxu0 0.0
    %1047 = vmatpush1.msra.mxu0 0.0
    %1048 = vmatprep.subr.mxu0 0.0
    %1049 = vmatpush1.msra.mxu0 0.0
    %1050 = vmatprep.subr.mxu0 0.0
    %1051 = vmatpush1.msra.mxu0 0.0
    %1052 = vmatprep.subr.mxu0 0.0
    %1053 = vmatpush1.msra.mxu0 0.0
    %1054 = vmatprep.subr.mxu0 0.0
    %1055 = vmatpush1.msra.mxu0 0.0
    %1056 = vmatprep.subr.mxu0 0.0
    %1057 = vmatpush1.msra.mxu0 %v1018
    %1058 = vmatprep.subr.mxu0 0.0
    %1059 = vmatpush1.msra.mxu0 %v1017
    %1060 = vmatprep.subr.mxu0 0.0
    %1061 = vmatpush1.msra.mxu0 %v1016
    %1062 = vmatprep.subr.mxu0 0.0
    %1063 = vmatpush1.msra.mxu0 %v1015
    %1064 = vmatprep.subr.mxu0 0.0
    %1065 = vmatpush2.msra.mxu0 0.0
    %1066 = vmatprep.subr.mxu0 0.0
    %1067 = vmatpush2.msra.mxu0 0.0
    %1068 = vmatprep.subr.mxu0 0.0
    %1069 = vmatpush2.msra.mxu0 0.0
    %1070 = vmatprep.subr.mxu0 0.0
    %1071 = vmatpush2.msra.mxu0 0.0
    %1072 = vmatprep.subr.mxu0 0.0
    %1073 = vmatpush2.msra.mxu0 0.0
    %1074 = vmatprep.subr.mxu0 0.0
    %1075 = vmatpush2.msra.mxu0 0.0
    %1076 = vmatprep.subr.mxu0 0.0
    %1077 = vmatpush2.msra.mxu0 0.0
    %1078 = vmatprep.subr.mxu0 0.0
    %1079 = vmatpush2.msra.mxu0 0.0
    %1080 = vmatprep.subr.mxu0 0.0
    %1081 = vmatpush2.msra.mxu0 0.0
    %1082 = vmatprep.subr.mxu0 0.0
    %1083 = vmatpush2.msra.mxu0 0.0
    %1084 = vmatprep.subr.mxu0 0.0
    %1085 = vmatpush2.msra.mxu0 0.0
    %1086 = vmatprep.subr.mxu0 0.0
    %1087 = vmatpush2.msra.mxu0 0.0
    %1088 = vmatprep.subr.mxu0 0.0
    %1089 = vmatpush2.msra.mxu0 0.0
    %1090 = vmatprep.subr.mxu0 0.0
    %1091 = vmatpush2.msra.mxu0 0.0
    %1092 = vmatprep.subr.mxu0 0.0
    %1093 = vmatpush2.msra.mxu0 0.0
    %1094 = vmatprep.subr.mxu0 0.0
    %1095 = vmatpush2.msra.mxu0 0.0
    %1096 = vmatprep.mubr.f32.mxu0 0.0
    %1097 = vmatmul.mubr.f32.gmra.mxu0 %v1030
    %v1098 = vpop.f32.mrf.mxu0
    %v1099 = vadd.f32 %v1024, %v1098
    %v1100 = vpop.f32.mrf.mxu0
    %1101 = vdwg.mxu0
    %1102 = vst [vmem:[#allocation8] sm:$0xff] %v1099
    // Predicated region
    $region30: #{tpu_custom_call.1} parent=1 // pred_check
      _
    $region31: #{tpu_custom_call.1} parent=1 // pred_check_branch
      %1104 = sbr.rel (0) target = $region33
    $region32: #{tpu_custom_call.1} parent=1 // pred_region
      %s1106 = ssub.s32 128, 128
      %1107 = vsyncadd [#allocation4], %s1106
      %s1109 = sshll.u32 [#allocation8], 4
      %s1110 = int_to_ptr.vmem [resolvable:$true] %s1109
      %1112 = dma.vmem_to_hbm [thread:$0]  %s1110, 128, %s4, [#allocation4]
    $region33: #{tpu_custom_call.1} parent=1 // pred_fallthru
      _
    // Predicated region
    $region34: #{tpu_custom_call.1} parent=1 // pred_check
      _
    $region35: #{tpu_custom_call.1} parent=1 // pred_check_branch
      %1114 = sbr.rel (0) target = $region37
    $region36: #{tpu_custom_call.1} parent=1 // pred_region
      %1115 = dma.done [#allocation4], 128
    $region37: #{tpu_custom_call.1} parent=1 // pred_fallthru
      _
    %1116 = vsyncpa [#allocation3], 1
    %1117 = vsyncpa [#allocation6], 1
    %1118 = vsyncpa [#allocation4], 1

</llo_original>
